<compile_context>
chip_gen: v7x
topology: tpu7x:2x2x1
jax: 0.10.0
libtpu: 0.0.40
codegen_flags: <defaults>
</compile_context>

<pallas_src>
import jax
import jax.numpy as jnp
from jax.experimental import pallas as pl
from jax.experimental.pallas import tpu as pltpu


def _round_up(a, m):
    return ((a + m - 1) // m) * m


def _batch_pad(batch, compute_dtype):
    sub = 16 if jnp.dtype(compute_dtype) == jnp.dtype(jnp.bfloat16) else 8
    return _round_up(max(batch, sub), sub)


# --------------------------------------------------------------------------
# Kernels
# --------------------------------------------------------------------------
def _xproj_kernel(x_ref, wx_ref, b_ref, out_ref):
    """Non-recurrent projection for all steps: (T*Bp, I) @ (I, Np) + b."""
    out_ref[...] = (
        jnp.dot(x_ref[...], wx_ref[...], preferred_element_type=jnp.float32)
        + b_ref[...]
    ).astype(out_ref.dtype)


def _rnn_seq_kernel(xproj_ref, wh_ref, h0_ref, mask_ref,
                    logp_ref, hout_ref, h_scratch):
    """One time step of the fused recurrence.

    xproj_ref : (1, Bp, Np)  precomputed x_t @ Wx + b   (streamed per step)
    wh_ref    : (Np, Np)     zero-padded recurrent weight (VMEM resident)
    h0_ref    : (Bp, Np)     initial hidden slab          (VMEM resident)
    mask_ref  : (1, Np)      additive mask: 0 on logit lanes, -inf elsewhere
    logp_ref  : (1, Bp, Np)  per-step output: log-probs at lanes [0, O)
    hout_ref  : (Bp, Np)     final hidden slab (written once at t == T-1)
    h_scratch : (Bp, Np) f32 carried hidden slab (never leaves VMEM)
    """
    t = pl.program_id(0)

    @pl.when(t == 0)
    def _():
        h_scratch[...] = h0_ref[...]

    h_prev = h_scratch[...]                                   # (Bp, Np) f32
    y = xproj_ref[0] + jnp.dot(h_prev.astype(wh_ref.dtype), wh_ref[...],
                               preferred_element_type=jnp.float32)
    # Carry the full slab: rows of wh outside the hidden lanes are zero, so
    # the non-hidden lanes are inert on the next step (no in-kernel slicing).
    h_scratch[...] = y

    # Log-softmax over the logit lanes only (additive -inf mask elsewhere);
    # single unmasked lane-dense (Bp, 128) store per step.
    masked = y + mask_ref[...]
    m = jnp.max(masked, axis=-1, keepdims=True)
    lse = jnp.log(jnp.sum(jnp.exp(masked - m), axis=-1, keepdims=True))
    logp_ref[0] = (masked - m - lse).astype(logp_ref.dtype)

    @pl.when(t == pl.num_programs(0) - 1)
    def _():
        hout_ref[...] = y.astype(hout_ref.dtype)


# --------------------------------------------------------------------------
# One-time parameter preprocessing (out of the per-step path)
# --------------------------------------------------------------------------
def prepare_params(w_i2h, b_i2h, w_i2o, b_i2o, *, compute_dtype=jnp.bfloat16):
    """w_i2h: (H, I+H), w_i2o: (O, I+H) in PyTorch nn.Linear layout."""
    hidden_size, fan_in = w_i2h.shape
    output_size = w_i2o.shape[0]
    input_size = fan_in - hidden_size

    n = output_size + hidden_size
    n_pad = _round_up(max(n, 128), 128)

    # Fused weight, columns ordered [i2o | i2h]:
    #   lanes [0, O)     -> logits (so log-probs are lane-0 aligned)
    #   lanes [O, O + H) -> new hidden
    w_full = jnp.concatenate([w_i2o.T, w_i2h.T], axis=1).astype(jnp.float32)
    w_full = jnp.pad(w_full, ((0, 0), (0, n_pad - n)))
    b_full = jnp.concatenate([b_i2o, b_i2h]).astype(jnp.float32)
    b_full = jnp.pad(b_full, (0, n_pad - n)).reshape(1, n_pad)

    wx = w_full[:input_size]                                  # (I, Np)
    wh = w_full[input_size:]                                  # (H, Np)
    wh_pad = jnp.zeros((n_pad, n_pad), jnp.float32)
    wh_pad = wh_pad.at[output_size:output_size + hidden_size].set(wh)

    lane = jnp.arange(n_pad)
    softmax_mask = jnp.where(lane < output_size, 0.0, -jnp.inf)
    softmax_mask = softmax_mask.astype(jnp.float32).reshape(1, n_pad)

    return {
        "wx": wx.astype(compute_dtype),                       # (I, Np)
        "wh_pad": wh_pad.astype(compute_dtype),               # (Np, Np)
        "b": b_full,                                          # (1, Np) f32
        "softmax_mask": softmax_mask,                         # (1, Np) f32
        "input_size": input_size,
        "hidden_size": hidden_size,
        "output_size": output_size,
        "n_pad": n_pad,
        "compute_dtype": compute_dtype,
    }


# --------------------------------------------------------------------------
# Wrappers
# --------------------------------------------------------------------------
def rnn_sequence(params, xs, h0):
    """Run T fused RNN steps.  xs: (T, B, I), h0: (B, H).
    Returns (log_probs (T, B, O), final_hidden (B, H))."""
    T, B, _ = xs.shape
    H = params["hidden_size"]
    O = params["output_size"]
    n_pad = params["n_pad"]
    cd = params["compute_dtype"]
    b_pad = _batch_pad(B, cd)

    # ---- one-time prologue (hoisted out of the recurrent path) ------------
    x_pad = jnp.pad(xs.astype(cd), ((0, 0), (0, b_pad - B), (0, 0)))
    x_flat = x_pad.reshape(T * b_pad, x_pad.shape[-1])
    # The initial hidden lives at lanes [O, O+H) of the carried slab.
    h0_slab = jnp.pad(h0.astype(jnp.float32),
                      ((0, b_pad - B), (O, n_pad - O - H)))

    full = lambda shape: pl.BlockSpec(shape, lambda: (0,) * len(shape))

    # Non-recurrent projection for all steps as ONE GEMM (M = T*Bp).
    # TODO(synk): tile the M dimension for long sequences instead of one full block.
    xproj = pl.pallas_call(
        _xproj_kernel,
        out_shape=jax.ShapeDtypeStruct((T * b_pad, n_pad), jnp.float32),
        grid=(),
        in_specs=[full(x_flat.shape), full(params["wx"].shape),
                  full(params["b"].shape)],
        out_specs=full((T * b_pad, n_pad)),
    )(x_flat, params["wx"], params["b"])
    xproj = xproj.reshape(T, b_pad, n_pad)

    # ---- fused recurrent loop: one pallas_call, grid over time ------------
    logp, h_last = pl.pallas_call(
        _rnn_seq_kernel,
        out_shape=(
            jax.ShapeDtypeStruct((T, b_pad, n_pad), jnp.float32),
            jax.ShapeDtypeStruct((b_pad, n_pad), jnp.float32),
        ),
        grid=(T,),
        in_specs=[
            pl.BlockSpec((1, b_pad, n_pad), lambda t: (t, 0, 0)),   # x-proj, streamed
            pl.BlockSpec((n_pad, n_pad), lambda t: (0, 0)),          # Wh, resident
            pl.BlockSpec((b_pad, n_pad), lambda t: (0, 0)),          # h0, resident
            pl.BlockSpec((1, n_pad), lambda t: (0, 0)),              # mask, resident
        ],
        out_specs=(
            pl.BlockSpec((1, b_pad, n_pad), lambda t: (t, 0, 0)),    # per-step log-probs
            pl.BlockSpec((b_pad, n_pad), lambda t: (0, 0)),          # final hidden slab
        ),
        scratch_shapes=[pltpu.VMEM((b_pad, n_pad), jnp.float32)],    # carried hidden
        compiler_params=pltpu.CompilerParams(
            dimension_semantics=("arbitrary",),
            vmem_limit_bytes=32 * 1024 * 1024,
        ),
    )(xproj, params["wh_pad"], h0_slab, params["softmax_mask"])

    log_probs = logp[:, :B, :O]            # lane-0-aligned slice
    final_hidden = h_last[:B, O:O + H]     # single slice, once, at the end
    return log_probs, final_hidden


def rnn_forward(params, x, hidden):
    """One RNN step (matches the PyTorch module's forward(input, hidden))."""
    log_probs, new_hidden = rnn_sequence(params, x[None], hidden)
    return log_probs[0], new_hidden


# --------------------------------------------------------------------------
# Pure-JAX reference (operands rounded through the same compute dtype)
# --------------------------------------------------------------------------
def _reference_cell(x, hidden, w_i2h, b_i2h, w_i2o, b_i2o, compute_dtype):
    def mm(a, w):
        return jnp.dot(a.astype(compute_dtype), w.astype(compute_dtype),
                       preferred_element_type=jnp.float32)
    combined = jnp.concatenate([x, hidden], axis=1)
    new_hidden = mm(combined, w_i2h.T) + b_i2h
    logits = mm(combined, w_i2o.T) + b_i2o
    return jax.nn.log_softmax(logits, axis=-1), new_hidden


if __name__ == "__main__":
    batch = 2
    input_size = 16
    hidden_size = 32
    output_size = 8
    seq_len = 3

    key = jax.random.PRNGKey(0)
    k = jax.random.split(key, 6)

    # Deterministic nn.Linear-style init (uniform(-bound, bound)).
    fan_in = input_size + hidden_size
    bound = 1.0 / (fan_in ** 0.5)
    w_i2h = jax.random.uniform(k[0], (hidden_size, fan_in), jnp.float32, -bound, bound)
    b_i2h = jax.random.uniform(k[1], (hidden_size,), jnp.float32, -bound, bound)
    w_i2o = jax.random.uniform(k[2], (output_size, fan_in), jnp.float32, -bound, bound)
    b_i2o = jax.random.uniform(k[3], (output_size,), jnp.float32, -bound, bound)

    # bf16 MXU operands (v5e/v6e/v7x native); accumulation + softmax stay f32.
    params = prepare_params(w_i2h, b_i2h, w_i2o, b_i2o, compute_dtype=jnp.bfloat16)

    h0 = jax.random.normal(k[4], (batch, hidden_size), jnp.float32)
    xs = jax.random.normal(k[5], (seq_len, batch, input_size), jnp.float32)

    run_seq = jax.jit(lambda xs_, h0_: rnn_sequence(params, xs_, h0_))
    log_probs, h_final = run_seq(xs, h0)
    jax.block_until_ready((log_probs, h_final))

    # Single-step entry point (the module's forward) for parity.
    step_logp, step_h = rnn_forward(params, xs[0], h0)
    jax.block_until_ready((step_logp, step_h))

    # Reference loop (operands rounded through the same compute dtype).
    ref_logps = []
    h_ref = h0
    ref_h_step0 = None
    for t in range(seq_len):
        lp, h_ref = _reference_cell(xs[t], h_ref, w_i2h, b_i2h, w_i2o, b_i2o,
                                    params["compute_dtype"])
        if t == 0:
            ref_h_step0 = h_ref
        ref_logps.append(lp)
    ref_logps = jnp.stack(ref_logps)

    assert log_probs.shape == (seq_len, batch, output_size)
    assert h_final.shape == (batch, hidden_size)
    # With bf16 operands, kernel vs. reference differ only by f32 accumulation
    # order, but a bf16 rounding-boundary flip in the carried hidden can show
    # up at ~1e-3, hence the tolerance.
    tol = dict(atol=5e-3, rtol=5e-3)
    assert jnp.allclose(log_probs, ref_logps, **tol), "sequence log_probs mismatch"
    assert jnp.allclose(h_final, h_ref, **tol), "final hidden mismatch"
    assert jnp.allclose(step_logp, ref_logps[0], **tol), "single-step log_probs mismatch"
    assert jnp.allclose(step_h, ref_h_step0, **tol), "single-step hidden mismatch"

    print("KERNEL_OK")
</pallas_src>

<mosaic_0001>
module attributes {stable_mosaic.version = 11 : i64} {
  func.func @_xproj_kernel(%arg0: memref<48x16xbf16, #tpu.memory_space<vmem>>, %arg1: memref<16x128xbf16, #tpu.memory_space<vmem>>, %arg2: memref<1x128xf32, #tpu.memory_space<vmem>>, %arg3: memref<48x128xf32, #tpu.memory_space<vmem>>) attributes {dimension_semantics = [], scalar_prefetch = 0 : i64, scratch_operands = 0 : i64, tpu.core_type = #tpu.core_type<tc>} {
    %c0 = arith.constant 0 : index
    %c0_0 = arith.constant 0 : index
    %0 = vector.load %arg0[%c0, %c0_0] : memref<48x16xbf16, #tpu.memory_space<vmem>>, vector<48x16xbf16>
    %c0_1 = arith.constant 0 : index
    %c0_2 = arith.constant 0 : index
    %1 = vector.load %arg1[%c0_1, %c0_2] : memref<16x128xbf16, #tpu.memory_space<vmem>>, vector<16x128xbf16>
    %cst = arith.constant dense<0.000000e+00> : vector<48x128xf32>
    %2 = tpu.matmul %0, %1, %cst {dimension_numbers = #tpu.dot_dimension_numbers<[1], [0], [0], [1], [0, 0, 1, 1], [], []>} : vector<48x16xbf16>, vector<16x128xbf16>, vector<48x128xf32> -> vector<48x128xf32>
    %c0_3 = arith.constant 0 : index
    %c0_4 = arith.constant 0 : index
    %3 = vector.load %arg2[%c0_3, %c0_4] : memref<1x128xf32, #tpu.memory_space<vmem>>, vector<1x128xf32>
    %4 = vector.broadcast %3 : vector<1x128xf32> to vector<48x128xf32>
    %5 = arith.addf %2, %4 : vector<48x128xf32>
    %c0_5 = arith.constant 0 : index
    %c0_6 = arith.constant 0 : index
    %6 = vector.load %arg3[%c0_5, %c0_6] : memref<48x128xf32, #tpu.memory_space<vmem>>, vector<48x128xf32>
    tpu.vector_store %arg3[%c0_5, %c0_6], %5 {strides = array<i32>} : memref<48x128xf32, #tpu.memory_space<vmem>>, vector<48x128xf32>,
    return
  }
}

module attributes {stable_mosaic.version = 11 : i64} {
  func.func @_rnn_seq_kernel(%arg0: i32, %arg1: memref<1x16x128xf32, #tpu.memory_space<vmem>>, %arg2: memref<128x128xbf16, #tpu.memory_space<vmem>>, %arg3: memref<16x128xf32, #tpu.memory_space<vmem>>, %arg4: memref<1x128xf32, #tpu.memory_space<vmem>>, %arg5: memref<1x16x128xf32, #tpu.memory_space<vmem>>, %arg6: memref<16x128xf32, #tpu.memory_space<vmem>>, %arg7: memref<16x128xf32, #tpu.memory_space<vmem>>) attributes {dimension_semantics = [#tpu.dimension_semantics<arbitrary>], iteration_bounds = array<i64: 3>, scalar_prefetch = 0 : i64, scratch_operands = 1 : i64, tpu.core_type = #tpu.core_type<tc>, window_params = [{transform_indices = @transform_0, window_bounds = array<i64: 1, 16, 128>}, {pipeline_mode = #tpu.pipeline_mode<synchronous>, transform_indices = @transform_1, window_bounds = array<i64: 128, 128>}, {pipeline_mode = #tpu.pipeline_mode<synchronous>, transform_indices = @transform_2, window_bounds = array<i64: 16, 128>}, {pipeline_mode = #tpu.pipeline_mode<synchronous>, transform_indices = @transform_3, window_bounds = array<i64: 1, 128>}, {transform_indices = @transform_4, window_bounds = array<i64: 1, 16, 128>}, {pipeline_mode = #tpu.pipeline_mode<synchronous>, transform_indices = @transform_5, window_bounds = array<i64: 16, 128>}]} {
    %c0_i32 = arith.constant 0 : i32
    %0 = arith.cmpi eq, %arg0, %c0_i32 : i32
    %1 = arith.extui %0 : i1 to i32
    %c0_i32_0 = arith.constant 0 : i32
    %2 = arith.cmpi ne, %1, %c0_i32_0 : i32
    scf.if %2 {
      %c0_17 = arith.constant 0 : index
      %c0_18 = arith.constant 0 : index
      %32 = vector.load %arg3[%c0_17, %c0_18] : memref<16x128xf32, #tpu.memory_space<vmem>>, vector<16x128xf32>
      %c0_19 = arith.constant 0 : index
      %c0_20 = arith.constant 0 : index
      %33 = vector.load %arg7[%c0_19, %c0_20] : memref<16x128xf32, #tpu.memory_space<vmem>>, vector<16x128xf32>
      tpu.vector_store %arg7[%c0_19, %c0_20], %32 {strides = array<i32>} : memref<16x128xf32, #tpu.memory_space<vmem>>, vector<16x128xf32>,
    } else {
    }
    %c0 = arith.constant 0 : index
    %c0_1 = arith.constant 0 : index
    %3 = vector.load %arg7[%c0, %c0_1] : memref<16x128xf32, #tpu.memory_space<vmem>>, vector<16x128xf32>
    %c0_2 = arith.constant 0 : index
    %c0_3 = arith.constant 0 : index
    %c0_4 = arith.constant 0 : index
    %4 = vector.load %arg1[%c0_2, %c0_3, %c0_4] : memref<1x16x128xf32, #tpu.memory_space<vmem>>, vector<1x16x128xf32>
    %5 = vector.shape_cast %4 : vector<1x16x128xf32> to vector<16x128xf32>
    %6 = arith.truncf %3 : vector<16x128xf32> to vector<16x128xbf16>
    %c0_5 = arith.constant 0 : index
    %c0_6 = arith.constant 0 : index
    %7 = vector.load %arg2[%c0_5, %c0_6] : memref<128x128xbf16, #tpu.memory_space<vmem>>, vector<128x128xbf16>
    %cst = arith.constant dense<0.000000e+00> : vector<16x128xf32>
    %8 = tpu.matmul %6, %7, %cst {dimension_numbers = #tpu.dot_dimension_numbers<[1], [0], [0], [1], [0, 0, 1, 1], [], []>} : vector<16x128xbf16>, vector<128x128xbf16>, vector<16x128xf32> -> vector<16x128xf32>
    %9 = arith.addf %5, %8 : vector<16x128xf32>
    %c0_7 = arith.constant 0 : index
    %c0_8 = arith.constant 0 : index
    %10 = vector.load %arg7[%c0_7, %c0_8] : memref<16x128xf32, #tpu.memory_space<vmem>>, vector<16x128xf32>
    tpu.vector_store %arg7[%c0_7, %c0_8], %9 {strides = array<i32>} : memref<16x128xf32, #tpu.memory_space<vmem>>, vector<16x128xf32>,
    %c0_9 = arith.constant 0 : index
    %c0_10 = arith.constant 0 : index
    %11 = vector.load %arg4[%c0_9, %c0_10] : memref<1x128xf32, #tpu.memory_space<vmem>>, vector<1x128xf32>
    %12 = vector.broadcast %11 : vector<1x128xf32> to vector<16x128xf32>
    %13 = arith.addf %9, %12 : vector<16x128xf32>
    %cst_11 = arith.constant dense<0xFF800000> : vector<16xf32>
    %14 = vector.multi_reduction <maximumf>, %13, %cst_11 [1] : vector<16x128xf32> to vector<16xf32>
    %15 = vector.shape_cast %14 : vector<16xf32> to vector<16x1xf32>
    %16 = vector.broadcast %15 : vector<16x1xf32> to vector<16x128xf32>
    %17 = arith.subf %13, %16 : vector<16x128xf32>
    %18 = math.exp %17 : vector<16x128xf32>
    %cst_12 = arith.constant dense<0.000000e+00> : vector<16xf32>
    %19 = vector.multi_reduction <add>, %18, %cst_12 [1] : vector<16x128xf32> to vector<16xf32>
    %20 = vector.shape_cast %19 : vector<16xf32> to vector<16x1xf32>
    %21 = math.log %20 : vector<16x1xf32>
    %22 = vector.broadcast %15 : vector<16x1xf32> to vector<16x128xf32>
    %23 = arith.subf %13, %22 : vector<16x128xf32>
    %24 = vector.broadcast %21 : vector<16x1xf32> to vector<16x128xf32>
    %25 = arith.subf %23, %24 : vector<16x128xf32>
    %c0_13 = arith.constant 0 : index
    %c0_14 = arith.constant 0 : index
    %c0_15 = arith.constant 0 : index
    %26 = vector.load %arg5[%c0_13, %c0_14, %c0_15] : memref<1x16x128xf32, #tpu.memory_space<vmem>>, vector<1x16x128xf32>
    %27 = vector.shape_cast %26 : vector<1x16x128xf32> to vector<16x128xf32>
    %28 = vector.shape_cast %25 : vector<16x128xf32> to vector<1x16x128xf32>
    tpu.vector_store %arg5[%c0_13, %c0_14, %c0_15], %28 {strides = array<i32>} : memref<1x16x128xf32, #tpu.memory_space<vmem>>, vector<1x16x128xf32>,
    %c2_i32 = arith.constant 2 : i32
    %29 = arith.cmpi eq, %arg0, %c2_i32 : i32
    %30 = arith.extui %29 : i1 to i32
    %c0_i32_16 = arith.constant 0 : i32
    %31 = arith.cmpi ne, %30, %c0_i32_16 : i32
    scf.if %31 {
      %c0_17 = arith.constant 0 : index
      %c0_18 = arith.constant 0 : index
      %32 = vector.load %arg6[%c0_17, %c0_18] : memref<16x128xf32, #tpu.memory_space<vmem>>, vector<16x128xf32>
      tpu.vector_store %arg6[%c0_17, %c0_18], %9 {strides = array<i32>} : memref<16x128xf32, #tpu.memory_space<vmem>>, vector<16x128xf32>,
    } else {
    }
    return
  }
  func.func @transform_0(%arg0: i32) -> (i32, i32, i32) {
    %c0_i32 = arith.constant 0 : i32
    %c0_i32_0 = arith.constant 0 : i32
    %c0_i32_1 = arith.constant 0 : i32
    return %arg0, %c0_i32, %c0_i32_0 : i32, i32, i32
  }
  func.func @transform_1(%arg0: i32) -> (i32, i32) {
    %c0_i32 = arith.constant 0 : i32
    %c0_i32_0 = arith.constant 0 : i32
    %c0_i32_1 = arith.constant 0 : i32
    return %c0_i32, %c0_i32_0 : i32, i32
  }
  func.func @transform_2(%arg0: i32) -> (i32, i32) {
    %c0_i32 = arith.constant 0 : i32
    %c0_i32_0 = arith.constant 0 : i32
    %c0_i32_1 = arith.constant 0 : i32
    return %c0_i32, %c0_i32_0 : i32, i32
  }
  func.func @transform_3(%arg0: i32) -> (i32, i32) {
    %c0_i32 = arith.constant 0 : i32
    %c0_i32_0 = arith.constant 0 : i32
    %c0_i32_1 = arith.constant 0 : i32
    return %c0_i32, %c0_i32_0 : i32, i32
  }
  func.func @transform_4(%arg0: i32) -> (i32, i32, i32) {
    %c0_i32 = arith.constant 0 : i32
    %c0_i32_0 = arith.constant 0 : i32
    %c0_i32_1 = arith.constant 0 : i32
    return %arg0, %c0_i32, %c0_i32_0 : i32, i32, i32
  }
  func.func @transform_5(%arg0: i32) -> (i32, i32) {
    %c0_i32 = arith.constant 0 : i32
    %c0_i32_0 = arith.constant 0 : i32
    %c0_i32_1 = arith.constant 0 : i32
    return %c0_i32, %c0_i32_0 : i32, i32
  }
}

</mosaic_0001>

<llo_original>
// kernel: _lambda_.2
$region0: #{_lambda_.2}
  #allocation0 [shape = 'u32[]', space=smem, size = 0x4, offset = 0x4, fixed_abs, tag = 'smem constant byte address 0x4 - core index']
  #allocation1 [shape = 'u32[144,128]{1,0:T(1,128)}', space=vmem, size = 0x12000, scoped, tag = 'internal scratch']
  %s0 = inlined_call_operand.vmem [shape: bf16[48,16], index: 0, kind: input, shape index: {}]
  %s1 = inlined_call_operand.vmem [shape: bf16[16,128], index: 1, kind: input, shape index: {}]
  %s2 = inlined_call_operand.vmem [shape: f32[1,128], index: 2, kind: input, shape index: {}]
  %s3 = inlined_call_operand.vmem [shape: f32[48,128], index: 3, kind: output, shape index: {}]
  %s4 = sld [smem:[#allocation0]]
  $region22: #{_lambda_.2} parent=0
    _
  %s6 = ssub.s32 1, %s4
  %s7 = scalar_select 0, %s6, %s4
  // Predicated region
  $region2: #{_lambda_.2} parent=0 // pred_check
    _
  $region3: #{_lambda_.2} parent=0 // pred_check_branch
    %9 = sbr.rel (0) target = $region5
  $region4: #{_lambda_.2} parent=0 // pred_region
    _
  $region5: #{_lambda_.2} parent=0 // pred_fallthru
    _
  // Predicated region
  $region6: #{_lambda_.2} parent=0 // pred_check
    _
  $region7: #{_lambda_.2} parent=0 // pred_check_branch
    %11 = sbr.rel (0) target = $region9
  $region8: #{_lambda_.2} parent=0 // pred_region
    _
  $region9: #{_lambda_.2} parent=0 // pred_fallthru
    _
  // Predicated region
  $region10: #{_lambda_.2} parent=0 // pred_check
    _
  $region11: #{_lambda_.2} parent=0 // pred_check_branch
    %13 = sbr.rel (0) target = $region13
  $region12: #{_lambda_.2} parent=0 // pred_region
    _
  $region13: #{_lambda_.2} parent=0 // pred_fallthru
    _
  %v15 = vld [vmem:[%s0] sm:$0xf]
  %v16 = vld [vmem:[%s0 + $0x4] sm:$0xf]
  %v17 = vld [vmem:[%s0 + $0x8] sm:$0xf]
  %v18 = vld [vmem:[%s0 + $0xc] sm:$0xf]
  %v19 = vld [vmem:[%s0 + $0x10] sm:$0xf]
  %v20 = vld [vmem:[%s0 + $0x14] sm:$0xf]
  %v21 = vld [vmem:[%s1] sm:$0xf]
  %v22 = vld [vmem:[%s1 + $0x4] sm:$0xf]
  %v23 = vld [vmem:[%s2] sm:$0x1]
  %v25 = vlaneseq
  %v26 = vshrl.u32 %v25, 7
  %v27 = vsub.s32 0, %v26
  %v28 = vrot.slane %v23, %v27
  %v36 = vunpack.c.l.b16 %v15
  %v37 = vunpack.c.l.b16 %v16
  %v38 = vunpack.c.l.b16 %v17
  %v39 = vunpack.c.l.b16 %v18
  %v40 = vunpack.c.l.b16 %v19
  %v41 = vunpack.c.l.b16 %v20
  %v42 = vpack.c.b16 %v37, %v36
  %v43 = vpack.c.b16 %v39, %v38
  %v44 = vpack.c.b16 %v41, %v40
  %v47 = vunpack.c.l.b16 %v21
  %v48 = vunpack.c.l.b16 %v22
  %v49 = vpack.c.b16 %v48, %v47
  %vm51 = vcmask 130048
  %v53 = vsel %vm51, %v42, 0
  %v56 = vsel %vm51, %v43, 0
  %v59 = vsel %vm51, %v44, 0
  %61 = vmatprep.subr.bf16.mxu0 0
  %62 = vmatpush1.bf16.msra.mxu0 %v49
  %63 = vmatprep.subr.bf16.mxu0 0
  %64 = vmatpush1.bf16.msra.mxu0 0
  %65 = vmatprep.subr.bf16.mxu0 0
  %66 = vmatpush1.bf16.msra.mxu0 0
  %67 = vmatprep.subr.bf16.mxu0 0
  %68 = vmatpush1.bf16.msra.mxu0 0
  %69 = vmatprep.subr.bf16.mxu0 0
  %70 = vmatpush1.bf16.msra.mxu0 0
  %71 = vmatprep.subr.bf16.mxu0 0
  %72 = vmatpush1.bf16.msra.mxu0 0
  %73 = vmatprep.subr.bf16.mxu0 0
  %74 = vmatpush1.bf16.msra.mxu0 0
  %75 = vmatprep.subr.bf16.mxu0 0
  %76 = vmatpush1.bf16.msra.mxu0 0
  %77 = vmatprep.subr.bf16.mxu0 0
  %78 = vmatpush1.bf16.msra.mxu0 0
  %79 = vmatprep.subr.bf16.mxu0 0
  %80 = vmatpush1.bf16.msra.mxu0 0
  %81 = vmatprep.subr.bf16.mxu0 0
  %82 = vmatpush1.bf16.msra.mxu0 0
  %83 = vmatprep.subr.bf16.mxu0 0
  %84 = vmatpush1.bf16.msra.mxu0 0
  %85 = vmatprep.subr.bf16.mxu0 0
  %86 = vmatpush1.bf16.msra.mxu0 0
  %87 = vmatprep.subr.bf16.mxu0 0
  %88 = vmatpush1.bf16.msra.mxu0 0
  %89 = vmatprep.subr.bf16.mxu0 0
  %90 = vmatpush1.bf16.msra.mxu0 0
  %91 = vmatprep.subr.bf16.mxu0 0
  %92 = vmatpush1.bf16.msra.mxu0 0
  %93 = vmatprep.mubr.bf16.mxu0 0
  %94 = vmatmul.mubr.bf16.gmra.mrb[0].mxu0 %v53
  %v95 = vpop.f32.mrb[0].mxu0
  %v96 = vadd.f32 %v28, %v95
  %v97 = vpop.f32.mrb[0].mxu0
  %v98 = vpop.f32.mrb[0].mxu0
  %v99 = vadd.f32 %v28, %v98
  %v100 = vpop.f32.mrb[0].mxu0
  %101 = vmatprep.mubr.bf16.mxu0 0
  %102 = vmatmul.mubr.bf16.gmra.mrb[0].mxu0 %v56
  %v103 = vpop.f32.mrb[0].mxu0
  %v104 = vadd.f32 %v28, %v103
  %v105 = vpop.f32.mrb[0].mxu0
  %v106 = vpop.f32.mrb[0].mxu0
  %v107 = vadd.f32 %v28, %v106
  %v108 = vpop.f32.mrb[0].mxu0
  %109 = vmatprep.mubr.bf16.mxu0 0
  %110 = vmatmul.mubr.bf16.gmra.mrb[0].mxu0 %v59
  %v111 = vpop.f32.mrb[0].mxu0
  %v112 = vadd.f32 %v28, %v111
  %v113 = vpop.f32.mrb[0].mxu0
  %v114 = vpop.f32.mrb[0].mxu0
  %v115 = vadd.f32 %v28, %v114
  %v116 = vpop.f32.mrb[0].mxu0
  %117 = vdwg.mxu0
  %118 = vst [vmem:[%s3] sm:$0xff] %v96
  %119 = vst [vmem:[%s3 + $0x8] sm:$0xff] %v99
  %120 = vst [vmem:[%s3 + $0x10] sm:$0xff] %v104
  %121 = vst [vmem:[%s3 + $0x18] sm:$0xff] %v107
  %122 = vst [vmem:[%s3 + $0x20] sm:$0xff] %v112
  %123 = vst [vmem:[%s3 + $0x28] sm:$0xff] %v115
  // Predicated region
  $region14: #{_lambda_.2} parent=0 // pred_check
    _
  $region15: #{_lambda_.2} parent=0 // pred_check_branch
    %125 = sbr.rel (0) target = $region17
  $region16: #{_lambda_.2} parent=0 // pred_region
    _
  $region17: #{_lambda_.2} parent=0 // pred_fallthru
    _
  // Predicated region
  $region18: #{_lambda_.2} parent=0 // pred_check
    _
  $region19: #{_lambda_.2} parent=0 // pred_check_branch
    %127 = sbr.rel (0) target = $region21
  $region20: #{_lambda_.2} parent=0 // pred_region
    _
  $region21: #{_lambda_.2} parent=0 // pred_fallthru
    _

// kernel: _lambda_.3
$region0: #{_lambda_.3}
  #allocation0 [shape = 'u32[]', space=smem, size = 0x4, offset = 0x4, fixed_abs, tag = 'smem constant byte address 0x4 - core index']
  #allocation1 [shape = 'u32[144,128]{1,0:T(1,128)}', space=vmem, size = 0x12000, scoped, tag = 'internal scratch']
  #allocation2 [shape = 'f32[16,128]{1,0:T(8,128)}', space=vmem, size = 0x2000, scoped, tag = 'scratch operand']
  %s0 = inlined_call_operand.vmem [shape: f32[3,16,128], index: 0, kind: input, shape index: {}]
  %s1 = inlined_call_operand.vmem [shape: bf16[128,128], index: 1, kind: input, shape index: {}]
  %s2 = inlined_call_operand.vmem [shape: f32[16,128], index: 2, kind: input, shape index: {}]
  %s3 = inlined_call_operand.vmem [shape: f32[1,128], index: 3, kind: input, shape index: {}]
  %s4 = inlined_call_operand.vmem [shape: f32[3,16,128], index: 4, kind: output, shape index: {0}]
  %s5 = inlined_call_operand.vmem [shape: f32[16,128], index: 5, kind: output, shape index: {1}]
  %6 = xla_tuple %s4, %s5
  %s7 = sld [smem:[#allocation0]]
  $region65: #{_lambda_.3} parent=0
    _
  %s9 = ssub.s32 1, %s7
  %s10 = scalar_select 0, %s9, %s7
  loop: start=0, step=1, limit=5
  $region2: #{_lambda_.3} parent=0 // loop_pre_header
    _
  $region3: #{_lambda_.3} parent=0 // loop_header
    %s12 = sphi 0, %s16
    %p13 = scmp.ge.s32.totalorder %s12, 5
    %s22 = sphi 0, %s24
    %s25 = sphi 0, %s22
    %s26 = sphi 0, %s25
    %s42 = sphi 0, %s26
    %s46 = sphi 0, %s46
    %s48 = sphi 0, %s46
    %s49 = sphi 0, %s48
    %s63 = sphi 0, %s49
    %s67 = sphi 0, %s67
    %s69 = sphi 0, %s67
    %s70 = sphi 0, %s69
    %s84 = sphi 0, %s70
    %s88 = sphi 0, %s88
    %s90 = sphi 0, %s88
    %s91 = sphi 0, %s90
    %s105 = sphi 0, %s91
    %s111 = sphi 0, %s113
    %s114 = sphi 0, %s111
    %s115 = sphi 0, %s114
    %s131 = sphi 0, %s115
    %s135 = sphi 0, %s135
    %s137 = sphi 0, %s135
    %s138 = sphi 0, %s137
    %s152 = sphi 0, %s138
  $region4: #{_lambda_.3} parent=0 // loop_header_branch
    %15 = sbr.rel (%p13) target = $region8
  $region5: #{_lambda_.3} parent=0 // loop_body
    %s17 = ssub.s32 %s12, 1
    %s18 = ssub.s32 %s12, 2
    %s19 = sadd.s32 %s12, 1
    %s20 = ssub.s32 %s12, %s19
    %p21 = scmp.eq.s32.totalorder %s20, 0
    %s23 = sadd.s32 %s22, 1
    %s24 = scalar_select %p21, %s22, %s23
    %p27 = pneg %p21
    %p28 = scmp.eq.s32.totalorder %s12, 2
    %p29 = por %p27, %p28
    %p30 = scmp.ne.s32.totalorder %s22, %s25
    %p31 = scmp.eq.s32.totalorder %s12, 0
    %p32 = por %p30, %p31
    %p33 = scmp.ne.s32.totalorder %s22, %s25
    %p34 = scmp.eq.s32.totalorder %s17, 2
    %p35 = por %p33, %p34
    %p36 = scmp.ne.s32.totalorder %s25, %s26
    %p37 = scmp.eq.s32.totalorder %s17, 0
    %p38 = por %p36, %p37
    %p39 = scmp.ne.s32.totalorder %s25, %s26
    %p40 = scmp.eq.s32.totalorder %s18, 2
    %p41 = por %p39, %p40
    %p43 = scmp.ne.s32.totalorder %s26, %s42
    %p44 = scmp.eq.s32.totalorder %s18, 0
    %p45 = por %p43, %p44
    %s47 = sadd.s32 %s46, 1
    %p50 = scmp.eq.s32.totalorder %s12, 2
    %p51 = scmp.ne.s32.totalorder %s46, %s48
    %p52 = scmp.eq.s32.totalorder %s12, 0
    %p53 = por %p51, %p52
    %p54 = scmp.ne.s32.totalorder %s46, %s48
    %p55 = scmp.eq.s32.totalorder %s17, 2
    %p56 = por %p54, %p55
    %p57 = scmp.ne.s32.totalorder %s48, %s49
    %p58 = scmp.eq.s32.totalorder %s17, 0
    %p59 = por %p57, %p58
    %p60 = scmp.ne.s32.totalorder %s48, %s49
    %p61 = scmp.eq.s32.totalorder %s18, 2
    %p62 = por %p60, %p61
    %p64 = scmp.ne.s32.totalorder %s49, %s63
    %p65 = scmp.eq.s32.totalorder %s18, 0
    %p66 = por %p64, %p65
    %s68 = sadd.s32 %s67, 1
    %p71 = scmp.eq.s32.totalorder %s12, 2
    %p72 = scmp.ne.s32.totalorder %s67, %s69
    %p73 = scmp.eq.s32.totalorder %s12, 0
    %p74 = por %p72, %p73
    %p75 = scmp.ne.s32.totalorder %s67, %s69
    %p76 = scmp.eq.s32.totalorder %s17, 2
    %p77 = por %p75, %p76
    %p78 = scmp.ne.s32.totalorder %s69, %s70
    %p79 = scmp.eq.s32.totalorder %s17, 0
    %p80 = por %p78, %p79
    %p81 = scmp.ne.s32.totalorder %s69, %s70
    %p82 = scmp.eq.s32.totalorder %s18, 2
    %p83 = por %p81, %p82
    %p85 = scmp.ne.s32.totalorder %s70, %s84
    %p86 = scmp.eq.s32.totalorder %s18, 0
    %p87 = por %p85, %p86
    %s89 = sadd.s32 %s88, 1
    %p92 = scmp.eq.s32.totalorder %s12, 2
    %p93 = scmp.ne.s32.totalorder %s88, %s90
    %p94 = scmp.eq.s32.totalorder %s12, 0
    %p95 = por %p93, %p94
    %p96 = scmp.ne.s32.totalorder %s88, %s90
    %p97 = scmp.eq.s32.totalorder %s17, 2
    %p98 = por %p96, %p97
    %p99 = scmp.ne.s32.totalorder %s90, %s91
    %p100 = scmp.eq.s32.totalorder %s17, 0
    %p101 = por %p99, %p100
    %p102 = scmp.ne.s32.totalorder %s90, %s91
    %p103 = scmp.eq.s32.totalorder %s18, 2
    %p104 = por %p102, %p103
    %p106 = scmp.ne.s32.totalorder %s91, %s105
    %p107 = scmp.eq.s32.totalorder %s18, 0
    %p108 = por %p106, %p107
    %s109 = ssub.s32 %s12, %s19
    %p110 = scmp.eq.s32.totalorder %s109, 0
    %s112 = sadd.s32 %s111, 1
    %s113 = scalar_select %p110, %s111, %s112
    %p116 = pneg %p110
    %p117 = scmp.eq.s32.totalorder %s12, 2
    %p118 = por %p116, %p117
    %p119 = scmp.ne.s32.totalorder %s111, %s114
    %p120 = scmp.eq.s32.totalorder %s12, 0
    %p121 = por %p119, %p120
    %p122 = scmp.ne.s32.totalorder %s111, %s114
    %p123 = scmp.eq.s32.totalorder %s17, 2
    %p124 = por %p122, %p123
    %p125 = scmp.ne.s32.totalorder %s114, %s115
    %p126 = scmp.eq.s32.totalorder %s17, 0
    %p127 = por %p125, %p126
    %p128 = scmp.ne.s32.totalorder %s114, %s115
    %p129 = scmp.eq.s32.totalorder %s18, 2
    %p130 = por %p128, %p129
    %p132 = scmp.ne.s32.totalorder %s115, %s131
    %p133 = scmp.eq.s32.totalorder %s18, 0
    %p134 = por %p132, %p133
    %s136 = sadd.s32 %s135, 1
    %p139 = scmp.eq.s32.totalorder %s12, 2
    %p140 = scmp.ne.s32.totalorder %s135, %s137
    %p141 = scmp.eq.s32.totalorder %s12, 0
    %p142 = por %p140, %p141
    %p143 = scmp.ne.s32.totalorder %s135, %s137
    %p144 = scmp.eq.s32.totalorder %s17, 2
    %p145 = por %p143, %p144
    %p146 = scmp.ne.s32.totalorder %s137, %s138
    %p147 = scmp.eq.s32.totalorder %s17, 0
    %p148 = por %p146, %p147
    %p149 = scmp.ne.s32.totalorder %s137, %s138
    %p150 = scmp.eq.s32.totalorder %s18, 2
    %p151 = por %p149, %p150
    %p153 = scmp.ne.s32.totalorder %s138, %s152
    %p154 = scmp.eq.s32.totalorder %s18, 0
    %p155 = por %p153, %p154
    %p156 = scmp.le.s32.totalorder 1, %s12
    %p157 = scmp.lt.s32.totalorder %s12, 4
    %p158 = pnand %p156, %p157
    %p159 = pneg %p158
    // Predicated region
    $region9: #{_lambda_.3} parent=5 // pred_check
      _
    $region10: #{_lambda_.3} parent=5 // pred_check_branch
      %161 = sbr.rel (%p158) target = $region12
    $region11: #{_lambda_.3} parent=5 // pred_region
      %s162 = ssub.s32 %s12, 1
      // Predicated region
      $region13: #{_lambda_.3} parent=11 // pred_check
        %p163 = pneg %p59
      $region14: #{_lambda_.3} parent=11 // pred_check_branch
        %165 = sbr.rel (%p163) target = $region16
      $region15: #{_lambda_.3} parent=11 // pred_region
        _
      $region16: #{_lambda_.3} parent=11 // pred_fallthru
        _
      // Predicated region
      $region17: #{_lambda_.3} parent=11 // pred_check
        %p166 = pneg %p80
      $region18: #{_lambda_.3} parent=11 // pred_check_branch
        %168 = sbr.rel (%p166) target = $region20
      $region19: #{_lambda_.3} parent=11 // pred_region
        _
      $region20: #{_lambda_.3} parent=11 // pred_fallthru
        _
      // Predicated region
      $region21: #{_lambda_.3} parent=11 // pred_check
        %p169 = pneg %p101
      $region22: #{_lambda_.3} parent=11 // pred_check_branch
        %171 = sbr.rel (%p169) target = $region24
      $region23: #{_lambda_.3} parent=11 // pred_region
        _
      $region24: #{_lambda_.3} parent=11 // pred_fallthru
        _
    $region12: #{_lambda_.3} parent=5 // pred_fallthru
      _
    %p172 = scmp.lt.s32.totalorder %s12, 3
    // Predicated region
    $region25: #{_lambda_.3} parent=5 // pred_check
      %p173 = pneg %p172
    $region26: #{_lambda_.3} parent=5 // pred_check_branch
      %175 = sbr.rel (%p173) target = $region28
    $region27: #{_lambda_.3} parent=5 // pred_region
      // Predicated region
      $region29: #{_lambda_.3} parent=27 // pred_check
        %p176 = pneg %p32
      $region30: #{_lambda_.3} parent=27 // pred_check_branch
        %178 = sbr.rel (%p176) target = $region32
      $region31: #{_lambda_.3} parent=27 // pred_region
        %p179 = scmp.lt.s32.totalorder %s12, 2
        %s180 = scalar_select %p179, %s12, 2
        %s181 = smul.addr %s180, 2
        %s182 = smul.addr %s181, 8
        %s183 = scalar_lea.vmem %s0, %s182
      $region32: #{_lambda_.3} parent=27 // pred_fallthru
        _
    $region28: #{_lambda_.3} parent=5 // pred_fallthru
      _
    %p184 = scmp.le.s32.totalorder 1, %s12
    %p185 = scmp.lt.s32.totalorder %s12, 4
    %p186 = pnand %p184, %p185
    %p187 = pneg %p186
    // Predicated region
    $region33: #{_lambda_.3} parent=5 // pred_check
      _
    $region34: #{_lambda_.3} parent=5 // pred_check_branch
      %189 = sbr.rel (%p186) target = $region36
    $region35: #{_lambda_.3} parent=5 // pred_region
      %s190 = ssub.s32 %s12, 1
      %p191 = scmp.lt.s32.totalorder %s17, 2
      %s192 = scalar_select %p191, %s17, 2
      %s193 = smul.addr %s192, 2
      %s194 = smul.addr %s193, 8
      %s195 = scalar_lea.vmem %s0, %s194
      %p196 = pneg %p38
      %p197 = pneg %p35
      %p198 = pneg %p59
      %p199 = pneg %p56
      %p200 = pneg %p80
      %p201 = pneg %p77
      %p202 = pneg %p101
      %p203 = pneg %p98
      %p204 = pneg %p127
      %p205 = pneg %p124
      %p206 = scmp.lt.s32.totalorder %s17, 2
      %s207 = scalar_select %p206, %s17, 2
      %s208 = smul.addr %s207, 2
      %s209 = smul.addr %s208, 8
      %s210 = scalar_lea.vmem %s4, %s209
      %p211 = pneg %p148
      %p212 = pneg %p145
      %p213 = scmp.lt.s32.totalorder %s17, 2
      %s214 = scalar_select %p213, %s17, 2
      %s215 = smul.addr %s214, 2
      %s216 = smul.addr %s215, 8
      %s217 = scalar_lea.vmem %s0, %s216
      %p218 = scmp.lt.s32.totalorder %s17, 2
      %s219 = scalar_select %p218, %s17, 2
      %s220 = smul.addr %s219, 2
      %s221 = smul.addr %s220, 8
      %s222 = scalar_lea.vmem %s4, %s221
      %p224 = scmp.eq.s32.totalorder %s17, 0
      // Predicated region
      $region37: #{_lambda_.3} parent=35 // pred_check
        %p225 = pneg %p224
      $region38: #{_lambda_.3} parent=35 // pred_check_branch
        %227 = sbr.rel (%p225) target = $region40
      $region39: #{_lambda_.3} parent=35 // pred_region
        %v228 = vld [vmem:[%s2] sm:$0xff]
        %v229 = vld [vmem:[%s2 + $0x8] sm:$0xff]
        %230 = vst [vmem:[#allocation2] sm:$0xff] %v228
        %231 = vst [vmem:[#allocation2 + $0x8] sm:$0xff] %v229
      $region40: #{_lambda_.3} parent=35 // pred_fallthru
        _
      %v232 = vld [vmem:[#allocation2] sm:$0xff]
      %v233 = vld [vmem:[#allocation2 + $0x8] sm:$0xff]
      %v234 = vld [vmem:[%s217] sm:$0xff]
      %v235 = vld [vmem:[%s217 + $0x8] sm:$0xff]
      %v236 = vpack.c.bf16 %v233, %v232
      %v237 = vld [vmem:[%s1] sm:$0xf]
      %v238 = vld [vmem:[%s1 + $0x4] sm:$0xf]
      %v239 = vld [vmem:[%s1 + $0x8] sm:$0xf]
      %v240 = vld [vmem:[%s1 + $0xc] sm:$0xf]
      %v241 = vld [vmem:[%s1 + $0x10] sm:$0xf]
      %v242 = vld [vmem:[%s1 + $0x14] sm:$0xf]
      %v243 = vld [vmem:[%s1 + $0x18] sm:$0xf]
      %v244 = vld [vmem:[%s1 + $0x1c] sm:$0xf]
      %v245 = vld [vmem:[%s1 + $0x20] sm:$0xf]
      %v246 = vld [vmem:[%s1 + $0x24] sm:$0xf]
      %v247 = vld [vmem:[%s1 + $0x28] sm:$0xf]
      %v248 = vld [vmem:[%s1 + $0x2c] sm:$0xf]
      %v249 = vld [vmem:[%s1 + $0x30] sm:$0xf]
      %v250 = vld [vmem:[%s1 + $0x34] sm:$0xf]
      %v251 = vld [vmem:[%s1 + $0x38] sm:$0xf]
      %v252 = vld [vmem:[%s1 + $0x3c] sm:$0xf]
      %v269 = vunpack.c.l.b16 %v237
      %v270 = vunpack.c.l.b16 %v238
      %v271 = vunpack.c.l.b16 %v239
      %v272 = vunpack.c.l.b16 %v240
      %v273 = vunpack.c.l.b16 %v241
      %v274 = vunpack.c.l.b16 %v242
      %v275 = vunpack.c.l.b16 %v243
      %v276 = vunpack.c.l.b16 %v244
      %v277 = vunpack.c.l.b16 %v245
      %v278 = vunpack.c.l.b16 %v246
      %v279 = vunpack.c.l.b16 %v247
      %v280 = vunpack.c.l.b16 %v248
      %v281 = vunpack.c.l.b16 %v249
      %v282 = vunpack.c.l.b16 %v250
      %v283 = vunpack.c.l.b16 %v251
      %v284 = vunpack.c.l.b16 %v252
      %v285 = vpack.c.b16 %v270, %v269
      %v286 = vpack.c.b16 %v272, %v271
      %v287 = vpack.c.b16 %v274, %v273
      %v288 = vpack.c.b16 %v276, %v275
      %v289 = vpack.c.b16 %v278, %v277
      %v290 = vpack.c.b16 %v280, %v279
      %v291 = vpack.c.b16 %v282, %v281
      %v292 = vpack.c.b16 %v284, %v283
      %301 = vmatprep.subr.bf16.mxu0 0
      %302 = vmatpush1.bf16.msra.mxu0 %v285
      %303 = vmatprep.subr.bf16.mxu0 0
      %304 = vmatpush1.bf16.msra.mxu0 %v286
      %305 = vmatprep.subr.bf16.mxu0 0
      %306 = vmatpush1.bf16.msra.mxu0 %v287
      %307 = vmatprep.subr.bf16.mxu0 0
      %308 = vmatpush1.bf16.msra.mxu0 %v288
      %309 = vmatprep.subr.bf16.mxu0 0
      %310 = vmatpush1.bf16.msra.mxu0 %v289
      %311 = vmatprep.subr.bf16.mxu0 0
      %312 = vmatpush1.bf16.msra.mxu0 %v290
      %313 = vmatprep.subr.bf16.mxu0 0
      %314 = vmatpush1.bf16.msra.mxu0 %v291
      %315 = vmatprep.subr.bf16.mxu0 0
      %316 = vmatpush1.bf16.msra.mxu0 %v292
      %317 = vmatprep.subr.bf16.mxu0 0
      %318 = vmatpush1.bf16.msra.mxu0 0
      %319 = vmatprep.subr.bf16.mxu0 0
      %320 = vmatpush1.bf16.msra.mxu0 0
      %321 = vmatprep.subr.bf16.mxu0 0
      %322 = vmatpush1.bf16.msra.mxu0 0
      %323 = vmatprep.subr.bf16.mxu0 0
      %324 = vmatpush1.bf16.msra.mxu0 0
      %325 = vmatprep.subr.bf16.mxu0 0
      %326 = vmatpush1.bf16.msra.mxu0 0
      %327 = vmatprep.subr.bf16.mxu0 0
      %328 = vmatpush1.bf16.msra.mxu0 0
      %329 = vmatprep.subr.bf16.mxu0 0
      %330 = vmatpush1.bf16.msra.mxu0 0
      %331 = vmatprep.subr.bf16.mxu0 0
      %332 = vmatpush1.bf16.msra.mxu0 0
      %333 = vmatprep.mubr.bf16.mxu0 0
      %334 = vmatmul.mubr.bf16.gmra.mrb[0].mxu0 %v236
      %v335 = vpop.f32.mrb[0].mxu0
      %v336 = vadd.f32 0.0, %v335
      %v337 = vpop.f32.mrb[0].mxu0
      %v338 = vpop.f32.mrb[0].mxu0
      %v339 = vadd.f32 0.0, %v338
      %v340 = vpop.f32.mrb[0].mxu0
      %341 = vdwg.mxu0
      %v342 = vadd.f32 %v234, %v336
      %v343 = vadd.f32 %v235, %v339
      %344 = vst [vmem:[#allocation2] sm:$0xff] %v342
      %345 = vst [vmem:[#allocation2 + $0x8] sm:$0xff] %v343
      %v346 = vld [vmem:[%s3] sm:$0x1]
      %v348 = vlaneseq
      %v349 = vshrl.u32 %v348, 7
      %v350 = vsub.s32 0, %v349
      %v351 = vrot.slane %v346, %v350
      %v353 = vadd.f32 %v342, %v351
      %v354 = vadd.f32 %v343, %v351
      %355 = vmax.xlane.f32.xlu0 %v353
      %v356 = vpop.xlane.xlu0 %355
      %357 = vmax.xlane.f32.xlu0 %v354
      %v358 = vpop.xlane.xlu0 %357
      %v359 = vsub.f32 %v353, %v356
      %v360 = vsub.f32 %v354, %v358
      %v361 = vmul.f32 %v359, 1.442695
      %v362 = vpow.pop %v361
      %v363 = vmul.f32 %v360, 1.442695
      %v364 = vpow.pop %v363
      %365 = vadd.xlane.f32.xlu0 %v362
      %v366 = vpop.xlane.xlu0 %365
      %367 = vadd.xlane.f32.xlu0 %v364
      %v368 = vpop.xlane.xlu0 %367
      %v369 = vlog2.pop %v366
      %v370 = vmul.f32 %v369, 0.6931472
      %v371 = vlog2.pop %v368
      %v372 = vmul.f32 %v371, 0.6931472
      %v373 = vsub.f32 %v359, %v370
      %v374 = vsub.f32 %v360, %v372
      %375 = vst [vmem:[%s222] sm:$0xff] %v373
      %376 = vst [vmem:[%s222 + $0x8] sm:$0xff] %v374
      %p377 = scmp.eq.s32.totalorder %s17, 2
      // Predicated region
      $region41: #{_lambda_.3} parent=35 // pred_check
        %p378 = pneg %p377
      $region42: #{_lambda_.3} parent=35 // pred_check_branch
        %380 = sbr.rel (%p378) target = $region44
      $region43: #{_lambda_.3} parent=35 // pred_region
        %381 = vst [vmem:[%s5] sm:$0xff] %v342
        %382 = vst [vmem:[%s5 + $0x8] sm:$0xff] %v343
      $region44: #{_lambda_.3} parent=35 // pred_fallthru
        _
      %p383 = scmp.lt.s32.totalorder %s17, 2
      %s384 = scalar_select %p383, %s17, 2
      %s385 = smul.addr %s384, 2
      %s386 = smul.addr %s385, 8
      %s387 = scalar_lea.vmem %s4, %s386
      // Predicated region
      $region45: #{_lambda_.3} parent=35 // pred_check
        %p388 = pneg %p124
      $region46: #{_lambda_.3} parent=35 // pred_check_branch
        %390 = sbr.rel (%p388) target = $region48
      $region47: #{_lambda_.3} parent=35 // pred_region
        _
      $region48: #{_lambda_.3} parent=35 // pred_fallthru
        _
      // Predicated region
      $region49: #{_lambda_.3} parent=35 // pred_check
        %p391 = pneg %p145
      $region50: #{_lambda_.3} parent=35 // pred_check_branch
        %393 = sbr.rel (%p391) target = $region52
      $region51: #{_lambda_.3} parent=35 // pred_region
        _
      $region52: #{_lambda_.3} parent=35 // pred_fallthru
        _
      // Predicated region
      $region53: #{_lambda_.3} parent=35 // pred_check
        %p394 = pneg %p145
      $region54: #{_lambda_.3} parent=35 // pred_check_branch
        %396 = sbr.rel (%p394) target = $region56
      $region55: #{_lambda_.3} parent=35 // pred_region
        _
      $region56: #{_lambda_.3} parent=35 // pred_fallthru
        _
    $region36: #{_lambda_.3} parent=5 // pred_fallthru
      _
    %p397 = scmp.le.s32.totalorder 2, %s12
    // Predicated region
    $region57: #{_lambda_.3} parent=5 // pred_check
      %p398 = pneg %p397
    $region58: #{_lambda_.3} parent=5 // pred_check_branch
      %400 = sbr.rel (%p398) target = $region60
    $region59: #{_lambda_.3} parent=5 // pred_region
      %s401 = ssub.s32 %s12, 2
      // Predicated region
      $region61: #{_lambda_.3} parent=59 // pred_check
        %p402 = pneg %p130
      $region62: #{_lambda_.3} parent=59 // pred_check_branch
        %404 = sbr.rel (%p402) target = $region64
      $region63: #{_lambda_.3} parent=59 // pred_region
        %p405 = scmp.lt.s32.totalorder %s18, 2
        %s406 = scalar_select %p405, %s18, 2
        %s407 = smul.addr %s406, 2
        %s408 = smul.addr %s407, 8
        %s409 = scalar_lea.vmem %s4, %s408
      $region64: #{_lambda_.3} parent=59 // pred_fallthru
        _
    $region60: #{_lambda_.3} parent=5 // pred_fallthru
      _
  $region6: #{_lambda_.3} parent=0 // loop_footer
    %s16 = sadd.s32 1, %s12
  $region7: #{_lambda_.3} parent=0 // loop_footer_branch
    %11 = sbr.rel target = $region3
  $region8: #{_lambda_.3} parent=0 // loop_exit
    _

</llo_original>
